<compile_context>
chip_gen: v7x
topology: tpu7x:2x2x1
jax: 0.10.0
libtpu: 0.0.40
codegen_flags: <defaults>
</compile_context>

<pallas_src>
import math

import jax
import jax.numpy as jnp
import numpy as np
from jax.experimental import pallas as pl
from jax.experimental.pallas import tpu as pltpu

# ------------------------- configuration (small shapes) -------------------------
B = 2          # batch
L = 8          # seq_len
D_MODEL = 64   # embedding dim
T_PERIOD = 1000

LANES = 128    # TPU lane width


# --------------------------------- the kernel -----------------------------------
def pos_enc_kernel(x_ref, pe_ref, o_ref):
    # x_ref, pe_ref, o_ref : (rows, 128) full-array VMEM blocks (rows == 8 here, so
    # exactly one f32 vreg each).  o_ref aliases x_ref's HBM buffer; the single
    # read-add-store below is safe under that aliasing.
    o_ref[...] = x_ref[...] + pe_ref[...]


# -------------------- host-side sinusoidal table (as in PyTorch) ----------------
def build_pe_table(t_period, d_model, dtype=jnp.float32):
    assert d_model % 2 == 0, "sinusoidal PE table requires even d_model"
    position = jnp.arange(t_period, dtype=dtype)[:, None]                       # (T, 1)
    div_term = jnp.exp(
        jnp.arange(0, d_model, 2, dtype=dtype) * (-math.log(t_period) / d_model)
    )                                                                           # (D/2,)
    pe = jnp.zeros((t_period, d_model), dtype)
    pe = pe.at[:, 0::2].set(jnp.sin(position * div_term))
    pe = pe.at[:, 1::2].set(jnp.cos(position * div_term))
    return pe


# ------------- build-time PE slab (hoisted out of the per-call path) ------------
def build_pe_slab(pe_table, batch, seq, d_model):
    """Pre-broadcast PE over batch and flatten to the (rows, 128) kernel layout."""
    total = batch * seq * d_model
    assert total % LANES == 0, "B*L*d_model must be a multiple of 128 for lane-dense tiles"
    slab = jnp.broadcast_to(pe_table[None, :seq, :], (batch, seq, d_model))
    return slab.reshape(total // LANES, LANES)                                  # (8, 128) here


# ------------------------------ wrapper / pallas_call ---------------------------
def positional_encoding_forward(x, pe_slab):
    """x: (B, L, d_model) float32; pe_slab: precomputed (B*L*d_model/128, 128) slab."""
    b, seq, d = x.shape
    total = b * seq * d
    assert total % LANES == 0, "B*L*d_model must be a multiple of 128 for lane-dense tiles"
    rows = total // LANES
    assert pe_slab.shape == (rows, LANES) and pe_slab.dtype == x.dtype

    x2 = x.reshape(rows, LANES)                    # (8, 128): one full sublane-dense vreg

    out = pl.pallas_call(
        pos_enc_kernel,
        out_shape=jax.ShapeDtypeStruct((rows, LANES), x.dtype),
        # No grid: single full-array VMEM blocks, no pipeline bookkeeping.
        in_specs=[
            pl.BlockSpec(memory_space=pltpu.MemorySpace.VMEM),
            pl.BlockSpec(memory_space=pltpu.MemorySpace.VMEM),
        ],
        out_specs=pl.BlockSpec(memory_space=pltpu.MemorySpace.VMEM),
        # Reuse x's HBM buffer for the output (pure elementwise add, same shape/dtype).
        input_output_aliases={0: 0},
    )(x2, pe_slab)
    return out.reshape(b, seq, d)


# ------------------------------------ main ---------------------------------------
if __name__ == "__main__":
    key = jax.random.PRNGKey(0)
    f32 = jnp.float32

    # Build-time constants (hoisted out of the per-call path).
    pe_table = build_pe_table(T_PERIOD, D_MODEL, f32)            # (T, D_MODEL)
    pe_slab = build_pe_slab(pe_table, B, L, D_MODEL)             # (8, 128)

    x = jax.random.normal(key, (B, L, D_MODEL)).astype(f32)      # (B, L, D_MODEL)

    # pure-JAX reference: x + pe[:, :L]  (eval-mode dropout = identity)
    ref = x + pe_table[None, :L, :]

    out = positional_encoding_forward(x, pe_slab)
    out = jax.block_until_ready(out)

    assert out.shape == (B, L, D_MODEL)
    assert np.allclose(np.asarray(out), np.asarray(ref), rtol=1e-6, atol=1e-6), \
        "Pallas kernel output mismatch vs JAX reference"

    print("KERNEL_OK")
</pallas_src>

<mosaic_0001>
module attributes {stable_mosaic.version = 11 : i64} {
  func.func @pos_enc_kernel(%arg0: memref<8x128xf32, #tpu.memory_space<vmem>>, %arg1: memref<8x128xf32, #tpu.memory_space<vmem>>, %arg2: memref<8x128xf32, #tpu.memory_space<vmem>>) attributes {dimension_semantics = [], scalar_prefetch = 0 : i64, scratch_operands = 0 : i64, tpu.core_type = #tpu.core_type<tc>} {
    %c0 = arith.constant 0 : index
    %c0_0 = arith.constant 0 : index
    %0 = vector.load %arg0[%c0, %c0_0] : memref<8x128xf32, #tpu.memory_space<vmem>>, vector<8x128xf32>
    %c0_1 = arith.constant 0 : index
    %c0_2 = arith.constant 0 : index
    %1 = vector.load %arg1[%c0_1, %c0_2] : memref<8x128xf32, #tpu.memory_space<vmem>>, vector<8x128xf32>
    %2 = arith.addf %0, %1 : vector<8x128xf32>
    %c0_3 = arith.constant 0 : index
    %c0_4 = arith.constant 0 : index
    %3 = vector.load %arg2[%c0_3, %c0_4] : memref<8x128xf32, #tpu.memory_space<vmem>>, vector<8x128xf32>
    tpu.vector_store %arg2[%c0_3, %c0_4], %2 {strides = array<i32>} : memref<8x128xf32, #tpu.memory_space<vmem>>, vector<8x128xf32>,
    return
  }
}

</mosaic_0001>

<llo_original>
// kernel: tpu_custom_call.1
$region0: #{tpu_custom_call.1}
  #allocation0 [shape = 'u32[]', space=smem, size = 0x4, offset = 0x4, fixed_abs, tag = 'smem constant byte address 0x4 - core index']
  #allocation1 [shape = 'u32[144,128]{1,0:T(1,128)}', space=vmem, size = 0x12000, scoped, tag = 'internal scratch']
  %s0 = inlined_call_operand.hbm [shape: f32[8,128], index: 0, kind: input, shape index: {}, may-alias: {0,2}]
  %s1 = inlined_call_operand.vmem [shape: f32[8,128], index: 1, kind: input, shape index: {}]
  %s2 = inlined_call_operand.hbm [shape: f32[8,128], index: 2, kind: output, shape index: {}, may-alias: {0,2}]
  %s3 = sld [smem:[#allocation0]]
  $region22: #{tpu_custom_call.1} parent=0
    _
  %s5 = ssub.s32 1, %s3
  %s6 = scalar_select 0, %s5, %s3
  $region1: #{tpu_custom_call.1} parent=0
    #allocation2 [shape = 'u8[4096]{0}', space=vmem, size = 0x1000, scoped, tag = 'input window, operand 0, single buffered']
    #allocation3 [shape = 's32[1]{0}', space=sflag, size = 0x4, scoped, tag = 'scoped memory for tpu_custom_call.1']
    #allocation4 [shape = 's32[1]{0}', space=sflag, size = 0x4, scoped, tag = 'scoped memory for tpu_custom_call.1']
    #allocation5 [shape = 'u8[4096]{0}', space=vmem, size = 0x1000, scoped, tag = 'output window, operand 0, single buffered']
    %7 = vsyncpa [#allocation3], 0
    %8 = vsyncpa [#allocation4], 0
    // Predicated region
    $region2: #{tpu_custom_call.1} parent=1 // pred_check
      _
    $region3: #{tpu_custom_call.1} parent=1 // pred_check_branch
      %10 = sbr.rel (0) target = $region5
    $region4: #{tpu_custom_call.1} parent=1 // pred_region
      %s12 = ssub.s32 128, 128
      %13 = vsyncadd [#allocation3], %s12
      %s15 = sshll.u32 [#allocation2], 4
      %s16 = int_to_ptr.vmem [resolvable:$true] %s15
      %18 = dma.hbm_to_vmem [thread:$0]  %s0, 128, %s16, [#allocation3]
    $region5: #{tpu_custom_call.1} parent=1 // pred_fallthru
      _
    // Predicated region
    $region6: #{tpu_custom_call.1} parent=1 // pred_check
      _
    $region7: #{tpu_custom_call.1} parent=1 // pred_check_branch
      %20 = sbr.rel (0) target = $region9
    $region8: #{tpu_custom_call.1} parent=1 // pred_region
      _
    $region9: #{tpu_custom_call.1} parent=1 // pred_fallthru
      _
    // Predicated region
    $region10: #{tpu_custom_call.1} parent=1 // pred_check
      _
    $region11: #{tpu_custom_call.1} parent=1 // pred_check_branch
      %22 = sbr.rel (0) target = $region13
    $region12: #{tpu_custom_call.1} parent=1 // pred_region
      %23 = dma.done [#allocation3], 128
    $region13: #{tpu_custom_call.1} parent=1 // pred_fallthru
      _
    %v24 = vld [vmem:[#allocation2] sm:$0xff]
    %v25 = vld [vmem:[%s1] sm:$0xff]
    %v26 = vadd.f32 %v24, %v25
    %27 = vst [vmem:[#allocation5] sm:$0xff] %v26
    // Predicated region
    $region14: #{tpu_custom_call.1} parent=1 // pred_check
      _
    $region15: #{tpu_custom_call.1} parent=1 // pred_check_branch
      %29 = sbr.rel (0) target = $region17
    $region16: #{tpu_custom_call.1} parent=1 // pred_region
      %s31 = ssub.s32 128, 128
      %32 = vsyncadd [#allocation4], %s31
      %s34 = sshll.u32 [#allocation5], 4
      %s35 = int_to_ptr.vmem [resolvable:$true] %s34
      %37 = dma.vmem_to_hbm [thread:$0]  %s35, 128, %s2, [#allocation4]
    $region17: #{tpu_custom_call.1} parent=1 // pred_fallthru
      _
    // Predicated region
    $region18: #{tpu_custom_call.1} parent=1 // pred_check
      _
    $region19: #{tpu_custom_call.1} parent=1 // pred_check_branch
      %39 = sbr.rel (0) target = $region21
    $region20: #{tpu_custom_call.1} parent=1 // pred_region
      %40 = dma.done [#allocation4], 128
    $region21: #{tpu_custom_call.1} parent=1 // pred_fallthru
      _
    %41 = vsyncpa [#allocation3], 1
    %42 = vsyncpa [#allocation4], 1

</llo_original>
